<compile_context>
chip_gen: v7x
topology: tpu7x:2x2x1
jax: 0.10.0
libtpu: 0.0.40
codegen_flags: <defaults>
</compile_context>

<pallas_src>
import jax
import jax.numpy as jnp
from jax.experimental import pallas as pl
from jax.experimental.pallas import tpu as pltpu

ALPHA = 0.3
BETA = 0.7
SMOOTH = 1.0

_VMEM_TILE_BUDGET = 20 * 1024 * 1024   # double-buffered inputs + f32 temporaries
_VMEM_LIMIT_BYTES = 32 * 1024 * 1024   # <= physical VMEM on v5e / v6e / v7x


def _round_up(a, b):
    return (a + b - 1) // b * b


def _tversky_partial_kernel(x_ref, lab_ref, tp_ref, sp_ref, sy_ref):
    """Grid = (spatial_chunks,) ("parallel"). One chunk -> one partial-sum slot."""
    x = x_ref[...].astype(jnp.float32)            # (B, C, TC)
    lab = lab_ref[...]                            # (B, TC) int32
    p = jax.nn.sigmoid(x)                         # apply_nonlin = sigmoid

    # Synthesize the one-hot target on the fly: y[b, c, s] = (label[b, s] == c).
    cls = jax.lax.broadcasted_iota(jnp.int32, x.shape, 1)
    y = (lab[:, None, :] == cls).astype(jnp.float32)

    # Only three partial sums are needed; fp/fn are derived outside the kernel:
    #   fp = sum(p) - tp,   fn = sum(y) - tp.
    tp_ref[0] = jnp.sum(p * y, axis=-1, keepdims=True)   # (B, C, 1)
    sp_ref[0] = jnp.sum(p, axis=-1, keepdims=True)
    sy_ref[0] = jnp.sum(y, axis=-1, keepdims=True)


@jax.jit
def tversky_loss(logits, labels):
    """logits: (B, C, H, W) float (any float dtype); labels: (B, H, W) int label map."""
    B, C, H, W = logits.shape
    M = H * W

    x = logits.reshape(B, C, M)                     # native dtype, no upcast
    lab = labels.reshape(B, M).astype(jnp.int32)

    # ---- choose the spatial chunk size TC (multiple of 128, VMEM-budgeted) ----
    x_item = x.dtype.itemsize
    # 2x double-buffered inputs + ~6 f32-sized temporaries over the (B, C, TC) block.
    per_col_bytes = 2 * (B * C * x_item + B * 4) + 6 * (B * C * 4)
    tc_cap = max(128, (_VMEM_TILE_BUDGET // per_col_bytes) // 128 * 128)

    if M < 256:
        # Tiny spatial extent: one full-extent chunk (exempt from the 128 rule).
        TC = M
        num_chunks = 1
        M_work = M
    else:
        # >= 2 chunks so both v7x TensorCores get work on the "parallel" axis.
        num_chunks = max(2, pl.cdiv(M, tc_cap))
        TC = _round_up(pl.cdiv(M, num_chunks), 128)
        M_work = _round_up(M, TC)
        num_chunks = M_work // TC

    if M_work != M:
        # sigmoid(-1e9) == 0 and label -1 matches no class, so padded columns
        # contribute nothing to any partial sum (zero-padding x would be wrong).
        x = jnp.pad(x, ((0, 0), (0, 0), (0, M_work - M)), constant_values=-1e9)
        lab = jnp.pad(lab, ((0, 0), (0, M_work - M)), constant_values=-1)

    part_shape = jax.ShapeDtypeStruct((num_chunks, B, C, 1), jnp.float32)
    out_block = pl.BlockSpec((1, B, C, 1), lambda j: (j, 0, 0, 0))

    tp_p, sp_p, sy_p = pl.pallas_call(
        _tversky_partial_kernel,
        out_shape=(part_shape, part_shape, part_shape),
        grid_spec=pltpu.PrefetchScalarGridSpec(
            num_scalar_prefetch=0,
            grid=(num_chunks,),
            in_specs=[
                pl.BlockSpec((B, C, TC), lambda j: (0, 0, j)),
                pl.BlockSpec((B, TC), lambda j: (0, j)),
            ],
            out_specs=[out_block, out_block, out_block],
        ),
        compiler_params=pltpu.CompilerParams(
            dimension_semantics=("parallel",),
            vmem_limit_bytes=_VMEM_LIMIT_BYTES,
        ),
    )(x, lab)

    # Tiny (num_chunks, B, C) finalize in plain JAX.
    tp = jnp.sum(tp_p[..., 0], axis=0)              # (B, C)
    fp = jnp.sum(sp_p[..., 0], axis=0) - tp
    fn = jnp.sum(sy_p[..., 0], axis=0) - tp
    tversky = (tp + SMOOTH) / (tp + ALPHA * fp + BETA * fn + SMOOTH)
    # do_bg=True, batch_dice=False -> mean over all (b, c).
    return 1.0 - jnp.mean(tversky)


def _reference(logits, labels):
    """Pure-JAX replica of the PyTorch forward (defaults) for verification."""
    p = jax.nn.sigmoid(logits.astype(jnp.float32))
    y = jax.nn.one_hot(labels, logits.shape[1], axis=1, dtype=jnp.float32)
    axes = (2, 3)
    tp = jnp.sum(p * y, axis=axes)
    fp = jnp.sum(p * (1.0 - y), axis=axes)
    fn = jnp.sum((1.0 - p) * y, axis=axes)
    tversky = (tp + SMOOTH) / (tp + ALPHA * fp + BETA * fn + SMOOTH)
    return 1.0 - jnp.mean(tversky)


if __name__ == "__main__":
    B, C, H, W = 2, 4, 16, 16
    key = jax.random.PRNGKey(0)
    k_logits, k_labels = jax.random.split(key)

    logits = jax.random.normal(k_logits, (B, C, H, W), dtype=jnp.float32)
    labels = jax.random.randint(k_labels, (B, H, W), 0, C, dtype=jnp.int32)

    loss = jax.block_until_ready(tversky_loss(logits, labels))
    ref = jax.block_until_ready(_reference(logits, labels))
    assert jnp.allclose(loss, ref, atol=1e-5, rtol=1e-5), (loss, ref)

    print("KERNEL_OK")
</pallas_src>

<mosaic_0001>
module attributes {stable_mosaic.version = 11 : i64} {
  func.func @_tversky_partial_kernel(%arg0: i32, %arg1: memref<2x4x128xf32, #tpu.memory_space<vmem>>, %arg2: memref<2x128xi32, #tpu.memory_space<vmem>>, %arg3: memref<1x2x4x1xf32, #tpu.memory_space<vmem>>, %arg4: memref<1x2x4x1xf32, #tpu.memory_space<vmem>>, %arg5: memref<1x2x4x1xf32, #tpu.memory_space<vmem>>) attributes {dimension_semantics = [#tpu.dimension_semantics<parallel>], iteration_bounds = array<i64: 2>, scalar_prefetch = 0 : i64, scratch_operands = 0 : i64, tpu.core_type = #tpu.core_type<tc>, window_params = [{transform_indices = @transform_0, window_bounds = array<i64: 2, 4, 128>}, {transform_indices = @transform_1, window_bounds = array<i64: 2, 128>}, {transform_indices = @transform_2, window_bounds = array<i64: 1, 2, 4, 1>}, {transform_indices = @transform_3, window_bounds = array<i64: 1, 2, 4, 1>}, {transform_indices = @transform_4, window_bounds = array<i64: 1, 2, 4, 1>}]} {
    %c0 = arith.constant 0 : index
    %c0_0 = arith.constant 0 : index
    %c0_1 = arith.constant 0 : index
    %0 = vector.load %arg1[%c0, %c0_0, %c0_1] : memref<2x4x128xf32, #tpu.memory_space<vmem>>, vector<2x4x128xf32>
    %c0_2 = arith.constant 0 : index
    %c0_3 = arith.constant 0 : index
    %1 = vector.load %arg2[%c0_2, %c0_3] : memref<2x128xi32, #tpu.memory_space<vmem>>, vector<2x128xi32>
    %2 = arith.negf %0 : vector<2x4x128xf32>
    %3 = math.exp %2 : vector<2x4x128xf32>
    %cst = arith.constant 1.000000e+00 : f32
    %4 = vector.broadcast %cst : f32 to vector<2x4x128xf32>
    %5 = arith.addf %4, %3 : vector<2x4x128xf32>
    %6 = arith.divf %4, %5 : vector<2x4x128xf32>
    %7 = tpu.iota {dimensions = array<i32: 1>} : vector<2x4x128xi32>
    %8 = vector.shape_cast %1 : vector<2x128xi32> to vector<2x1x128xi32>
    %9 = vector.broadcast %8 : vector<2x1x128xi32> to vector<2x4x128xi32>
    %10 = arith.cmpi eq, %9, %7 : vector<2x4x128xi32>
    %11 = arith.extui %10 : vector<2x4x128xi1> to vector<2x4x128xi32>
    %12 = arith.sitofp %11 : vector<2x4x128xi32> to vector<2x4x128xf32>
    %13 = arith.mulf %6, %12 : vector<2x4x128xf32>
    %cst_4 = arith.constant dense<0.000000e+00> : vector<2x4xf32>
    %14 = vector.multi_reduction <add>, %13, %cst_4 [2] : vector<2x4x128xf32> to vector<2x4xf32>
    %15 = vector.shape_cast %14 : vector<2x4xf32> to vector<2x4x1xf32>
    %c0_5 = arith.constant 0 : index
    %c0_6 = arith.constant 0 : index
    %c0_7 = arith.constant 0 : index
    %c0_8 = arith.constant 0 : index
    %16 = vector.load %arg3[%c0_5, %c0_6, %c0_7, %c0_8] : memref<1x2x4x1xf32, #tpu.memory_space<vmem>>, vector<1x2x4x1xf32>
    %17 = vector.shape_cast %16 : vector<1x2x4x1xf32> to vector<2x4x1xf32>
    %18 = vector.shape_cast %15 : vector<2x4x1xf32> to vector<1x2x4x1xf32>
    tpu.vector_store %arg3[%c0_5, %c0_6, %c0_7, %c0_8], %18 {strides = array<i32>} : memref<1x2x4x1xf32, #tpu.memory_space<vmem>>, vector<1x2x4x1xf32>,
    %cst_9 = arith.constant dense<0.000000e+00> : vector<2x4xf32>
    %19 = vector.multi_reduction <add>, %6, %cst_9 [2] : vector<2x4x128xf32> to vector<2x4xf32>
    %20 = vector.shape_cast %19 : vector<2x4xf32> to vector<2x4x1xf32>
    %c0_10 = arith.constant 0 : index
    %c0_11 = arith.constant 0 : index
    %c0_12 = arith.constant 0 : index
    %c0_13 = arith.constant 0 : index
    %21 = vector.load %arg4[%c0_10, %c0_11, %c0_12, %c0_13] : memref<1x2x4x1xf32, #tpu.memory_space<vmem>>, vector<1x2x4x1xf32>
    %22 = vector.shape_cast %21 : vector<1x2x4x1xf32> to vector<2x4x1xf32>
    %23 = vector.shape_cast %20 : vector<2x4x1xf32> to vector<1x2x4x1xf32>
    tpu.vector_store %arg4[%c0_10, %c0_11, %c0_12, %c0_13], %23 {strides = array<i32>} : memref<1x2x4x1xf32, #tpu.memory_space<vmem>>, vector<1x2x4x1xf32>,
    %cst_14 = arith.constant dense<0.000000e+00> : vector<2x4xf32>
    %24 = vector.multi_reduction <add>, %12, %cst_14 [2] : vector<2x4x128xf32> to vector<2x4xf32>
    %25 = vector.shape_cast %24 : vector<2x4xf32> to vector<2x4x1xf32>
    %c0_15 = arith.constant 0 : index
    %c0_16 = arith.constant 0 : index
    %c0_17 = arith.constant 0 : index
    %c0_18 = arith.constant 0 : index
    %26 = vector.load %arg5[%c0_15, %c0_16, %c0_17, %c0_18] : memref<1x2x4x1xf32, #tpu.memory_space<vmem>>, vector<1x2x4x1xf32>
    %27 = vector.shape_cast %26 : vector<1x2x4x1xf32> to vector<2x4x1xf32>
    %28 = vector.shape_cast %25 : vector<2x4x1xf32> to vector<1x2x4x1xf32>
    tpu.vector_store %arg5[%c0_15, %c0_16, %c0_17, %c0_18], %28 {strides = array<i32>} : memref<1x2x4x1xf32, #tpu.memory_space<vmem>>, vector<1x2x4x1xf32>,
    return
  }
  func.func @transform_0(%arg0: i32) -> (i32, i32, i32) {
    %c0_i32 = arith.constant 0 : i32
    %c0_i32_0 = arith.constant 0 : i32
    %c0_i32_1 = arith.constant 0 : i32
    return %c0_i32, %c0_i32_0, %arg0 : i32, i32, i32
  }
  func.func @transform_1(%arg0: i32) -> (i32, i32) {
    %c0_i32 = arith.constant 0 : i32
    %c0_i32_0 = arith.constant 0 : i32
    return %c0_i32, %arg0 : i32, i32
  }
  func.func @transform_2(%arg0: i32) -> (i32, i32, i32, i32) {
    %c0_i32 = arith.constant 0 : i32
    %c0_i32_0 = arith.constant 0 : i32
    %c0_i32_1 = arith.constant 0 : i32
    %c0_i32_2 = arith.constant 0 : i32
    return %arg0, %c0_i32, %c0_i32_0, %c0_i32_1 : i32, i32, i32, i32
  }
  func.func @transform_3(%arg0: i32) -> (i32, i32, i32, i32) {
    %c0_i32 = arith.constant 0 : i32
    %c0_i32_0 = arith.constant 0 : i32
    %c0_i32_1 = arith.constant 0 : i32
    %c0_i32_2 = arith.constant 0 : i32
    return %arg0, %c0_i32, %c0_i32_0, %c0_i32_1 : i32, i32, i32, i32
  }
  func.func @transform_4(%arg0: i32) -> (i32, i32, i32, i32) {
    %c0_i32 = arith.constant 0 : i32
    %c0_i32_0 = arith.constant 0 : i32
    %c0_i32_1 = arith.constant 0 : i32
    %c0_i32_2 = arith.constant 0 : i32
    return %arg0, %c0_i32, %c0_i32_0, %c0_i32_1 : i32, i32, i32, i32
  }
}

</mosaic_0001>

<llo_original>
// kernel: tversky_loss.1
$region0: #{tversky_loss.1}
  #allocation0 [shape = 'u32[]', space=smem, size = 0x4, offset = 0x4, fixed_abs, tag = 'smem constant byte address 0x4 - core index']
  #allocation1 [shape = 'u32[144,128]{1,0:T(1,128)}', space=vmem, size = 0x12000, scoped, tag = 'internal scratch']
  %s0 = inlined_call_operand.vmem [shape: f32[2,4,256], index: 0, kind: input, shape index: {}]
  %s1 = inlined_call_operand.vmem [shape: s32[2,256], index: 1, kind: input, shape index: {}]
  %s2 = inlined_call_operand.vmem [shape: f32[2,2,4,1], index: 2, kind: output, shape index: {0}]
  %s3 = inlined_call_operand.vmem [shape: f32[2,2,4,1], index: 3, kind: output, shape index: {1}]
  %s4 = inlined_call_operand.vmem [shape: f32[2,2,4,1], index: 4, kind: output, shape index: {2}]
  %5 = xla_tuple %s2, %s3, %s4
  %s6 = sld [smem:[#allocation0]]
  $region98: #{tversky_loss.1} parent=0
    _
  %s8 = ssub.s32 1, %s6
  %s9 = scalar_select 0, %s8, %s6
  $region1: #{tversky_loss.1} parent=0
    #allocation2 [shape = 'u8[8192]{0}', space=vmem, size = 0x2000, scoped, tag = 'input window, operand 0']
    loop: start=0, step=1, limit=4
    $region2: #{tversky_loss.1} parent=1 // loop_pre_header
      _
    $region3: #{tversky_loss.1} parent=1 // loop_header
      %s11 = sphi 0, %s15
      %p12 = scmp.ge.s32.totalorder %s11, 4
      %s21 = sphi 0, %s23
      %s24 = sphi 0, %s21
      %s25 = sphi 0, %s24
      %s41 = sphi 0, %s25
      %s47 = sphi 0, %s49
      %s50 = sphi 0, %s47
      %s51 = sphi 0, %s50
      %s67 = sphi 0, %s51
      %s73 = sphi 0, %s75
      %s76 = sphi 0, %s73
      %s77 = sphi 0, %s76
      %s93 = sphi 0, %s77
      %s99 = sphi 0, %s101
      %s102 = sphi 0, %s99
      %s103 = sphi 0, %s102
      %s119 = sphi 0, %s103
      %s125 = sphi 0, %s127
      %s128 = sphi 0, %s125
      %s129 = sphi 0, %s128
      %s145 = sphi 0, %s129
    $region4: #{tversky_loss.1} parent=1 // loop_header_branch
      %14 = sbr.rel (%p12) target = $region8
    $region5: #{tversky_loss.1} parent=1 // loop_body
      %s16 = ssub.s32 %s11, 1
      %s17 = ssub.s32 %s11, 2
      %s18 = sadd.s32 %s11, 1
      %s19 = ssub.s32 %s11, %s18
      %p20 = scmp.eq.s32.totalorder %s19, 0
      %s22 = sadd.s32 %s21, 1
      %s23 = scalar_select %p20, %s21, %s22
      %p26 = pneg %p20
      %p27 = scmp.eq.s32.totalorder %s11, 1
      %p28 = por %p26, %p27
      %p29 = scmp.ne.s32.totalorder %s21, %s24
      %p30 = scmp.eq.s32.totalorder %s11, 0
      %p31 = por %p29, %p30
      %p32 = scmp.ne.s32.totalorder %s21, %s24
      %p33 = scmp.eq.s32.totalorder %s16, 1
      %p34 = por %p32, %p33
      %p35 = scmp.ne.s32.totalorder %s24, %s25
      %p36 = scmp.eq.s32.totalorder %s16, 0
      %p37 = por %p35, %p36
      %p38 = scmp.ne.s32.totalorder %s24, %s25
      %p39 = scmp.eq.s32.totalorder %s17, 1
      %p40 = por %p38, %p39
      %p42 = scmp.ne.s32.totalorder %s25, %s41
      %p43 = scmp.eq.s32.totalorder %s17, 0
      %p44 = por %p42, %p43
      %s45 = ssub.s32 %s11, %s18
      %p46 = scmp.eq.s32.totalorder %s45, 0
      %s48 = sadd.s32 %s47, 1
      %s49 = scalar_select %p46, %s47, %s48
      %p52 = pneg %p46
      %p53 = scmp.eq.s32.totalorder %s11, 1
      %p54 = por %p52, %p53
      %p55 = scmp.ne.s32.totalorder %s47, %s50
      %p56 = scmp.eq.s32.totalorder %s11, 0
      %p57 = por %p55, %p56
      %p58 = scmp.ne.s32.totalorder %s47, %s50
      %p59 = scmp.eq.s32.totalorder %s16, 1
      %p60 = por %p58, %p59
      %p61 = scmp.ne.s32.totalorder %s50, %s51
      %p62 = scmp.eq.s32.totalorder %s16, 0
      %p63 = por %p61, %p62
      %p64 = scmp.ne.s32.totalorder %s50, %s51
      %p65 = scmp.eq.s32.totalorder %s17, 1
      %p66 = por %p64, %p65
      %p68 = scmp.ne.s32.totalorder %s51, %s67
      %p69 = scmp.eq.s32.totalorder %s17, 0
      %p70 = por %p68, %p69
      %s71 = ssub.s32 %s11, %s18
      %p72 = scmp.eq.s32.totalorder %s71, 0
      %s74 = sadd.s32 %s73, 1
      %s75 = scalar_select %p72, %s73, %s74
      %p78 = pneg %p72
      %p79 = scmp.eq.s32.totalorder %s11, 1
      %p80 = por %p78, %p79
      %p81 = scmp.ne.s32.totalorder %s73, %s76
      %p82 = scmp.eq.s32.totalorder %s11, 0
      %p83 = por %p81, %p82
      %p84 = scmp.ne.s32.totalorder %s73, %s76
      %p85 = scmp.eq.s32.totalorder %s16, 1
      %p86 = por %p84, %p85
      %p87 = scmp.ne.s32.totalorder %s76, %s77
      %p88 = scmp.eq.s32.totalorder %s16, 0
      %p89 = por %p87, %p88
      %p90 = scmp.ne.s32.totalorder %s76, %s77
      %p91 = scmp.eq.s32.totalorder %s17, 1
      %p92 = por %p90, %p91
      %p94 = scmp.ne.s32.totalorder %s77, %s93
      %p95 = scmp.eq.s32.totalorder %s17, 0
      %p96 = por %p94, %p95
      %s97 = ssub.s32 %s11, %s18
      %p98 = scmp.eq.s32.totalorder %s97, 0
      %s100 = sadd.s32 %s99, 1
      %s101 = scalar_select %p98, %s99, %s100
      %p104 = pneg %p98
      %p105 = scmp.eq.s32.totalorder %s11, 1
      %p106 = por %p104, %p105
      %p107 = scmp.ne.s32.totalorder %s99, %s102
      %p108 = scmp.eq.s32.totalorder %s11, 0
      %p109 = por %p107, %p108
      %p110 = scmp.ne.s32.totalorder %s99, %s102
      %p111 = scmp.eq.s32.totalorder %s16, 1
      %p112 = por %p110, %p111
      %p113 = scmp.ne.s32.totalorder %s102, %s103
      %p114 = scmp.eq.s32.totalorder %s16, 0
      %p115 = por %p113, %p114
      %p116 = scmp.ne.s32.totalorder %s102, %s103
      %p117 = scmp.eq.s32.totalorder %s17, 1
      %p118 = por %p116, %p117
      %p120 = scmp.ne.s32.totalorder %s103, %s119
      %p121 = scmp.eq.s32.totalorder %s17, 0
      %p122 = por %p120, %p121
      %s123 = ssub.s32 %s11, %s18
      %p124 = scmp.eq.s32.totalorder %s123, 0
      %s126 = sadd.s32 %s125, 1
      %s127 = scalar_select %p124, %s125, %s126
      %p130 = pneg %p124
      %p131 = scmp.eq.s32.totalorder %s11, 1
      %p132 = por %p130, %p131
      %p133 = scmp.ne.s32.totalorder %s125, %s128
      %p134 = scmp.eq.s32.totalorder %s11, 0
      %p135 = por %p133, %p134
      %p136 = scmp.ne.s32.totalorder %s125, %s128
      %p137 = scmp.eq.s32.totalorder %s16, 1
      %p138 = por %p136, %p137
      %p139 = scmp.ne.s32.totalorder %s128, %s129
      %p140 = scmp.eq.s32.totalorder %s16, 0
      %p141 = por %p139, %p140
      %p142 = scmp.ne.s32.totalorder %s128, %s129
      %p143 = scmp.eq.s32.totalorder %s17, 1
      %p144 = por %p142, %p143
      %p146 = scmp.ne.s32.totalorder %s129, %s145
      %p147 = scmp.eq.s32.totalorder %s17, 0
      %p148 = por %p146, %p147
      %p149 = scmp.le.s32.totalorder 1, %s11
      %p150 = scmp.lt.s32.totalorder %s11, 3
      %p151 = pnand %p149, %p150
      %p152 = pneg %p151
      // Predicated region
      $region9: #{tversky_loss.1} parent=5 // pred_check
        _
      $region10: #{tversky_loss.1} parent=5 // pred_check_branch
        %154 = sbr.rel (%p151) target = $region12
      $region11: #{tversky_loss.1} parent=5 // pred_region
        %s155 = ssub.s32 %s11, 1
      $region12: #{tversky_loss.1} parent=5 // pred_fallthru
        _
      %p156 = scmp.lt.s32.totalorder %s11, 2
      // Predicated region
      $region13: #{tversky_loss.1} parent=5 // pred_check
        %p157 = pneg %p156
      $region14: #{tversky_loss.1} parent=5 // pred_check_branch
        %159 = sbr.rel (%p157) target = $region16
      $region15: #{tversky_loss.1} parent=5 // pred_region
        // Predicated region
        $region17: #{tversky_loss.1} parent=15 // pred_check
          %p160 = pneg %p31
        $region18: #{tversky_loss.1} parent=15 // pred_check_branch
          %162 = sbr.rel (%p160) target = $region20
        $region19: #{tversky_loss.1} parent=15 // pred_region
          %s163 = sand.u32 %s21, 1
          %s164 = sand.u32 %s21, 1
          %s165 = smul.addr %s164, 8
          %s166 = scalar_lea.vmem [#allocation2], %s165
          %s167 = smul.addr %s11, 4
          %s168 = scalar_lea.vmem %s0, %s167
          // Predicated region
          $region21: #{tversky_loss.1} parent=19 // pred_check
            _
          $region22: #{tversky_loss.1} parent=19 // pred_check_branch
            %170 = sbr.rel (0) target = $region24
          $region23: #{tversky_loss.1} parent=19 // pred_region
            // Predicated region
            $region25: #{tversky_loss.1} parent=23 // pred_check
              _
            $region26: #{tversky_loss.1} parent=23 // pred_check_branch
              %172 = sbr.rel target = $region28
            $region27: #{tversky_loss.1} parent=23 // pred_region
              // Predicated region
              $region40: #{tversky_loss.1} parent=27 // pred_check
                _
              $region41: #{tversky_loss.1} parent=27 // pred_check_branch
                %189 = sbr.rel (0) target = $region43
              $region42: #{tversky_loss.1} parent=27 // pred_region
                loop: start=0, step=1, limit=1
                $region44: #{tversky_loss.1} parent=42 // loop_pre_header
                  _
                $region45: #{tversky_loss.1} parent=42 // loop_header
                  %s191 = sphi 0, %s195
                  %p192 = scmp.ge.s32.totalorder %s191, 1
                  %s196 = sphi %s168, %s168
                  %s197 = sphi %s166, %s166
                $region46: #{tversky_loss.1} parent=42 // loop_header_branch
                  %194 = sbr.rel (%p192) target = $region50
                $region47: #{tversky_loss.1} parent=42 // loop_body
                  _
                $region48: #{tversky_loss.1} parent=42 // loop_footer
                  %s195 = sadd.s32 1, %s191
                $region49: #{tversky_loss.1} parent=42 // loop_footer_branch
                  %190 = sbr.rel target = $region45
                $region50: #{tversky_loss.1} parent=42 // loop_exit
                  _
                loop: start=0, step=1, limit=1
                $region51: #{tversky_loss.1} parent=42 // loop_pre_header
                  _
                $region52: #{tversky_loss.1} parent=42 // loop_header
                  %s200 = sphi 0, %s204
                  %p201 = scmp.ge.s32.totalorder %s200, 1
                  %s205 = sphi %s168, %s168
                  %s206 = sphi %s166, %s166
                $region53: #{tversky_loss.1} parent=42 // loop_header_branch
                  %203 = sbr.rel (%p201) target = $region57
                $region54: #{tversky_loss.1} parent=42 // loop_body
                  %v207 = vld [vmem:[%s205] sm:$0xf]
                  %208 = vst [vmem:[%s206] sm:$0xf] %v207
                  %v209 = vld [vmem:[%s205 + $0x8] sm:$0xf]
                  %210 = vst [vmem:[%s206 + $0x4] sm:$0xf] %v209
                $region55: #{tversky_loss.1} parent=42 // loop_footer
                  %s204 = sadd.s32 1, %s200
                $region56: #{tversky_loss.1} parent=42 // loop_footer_branch
                  %199 = sbr.rel target = $region52
                $region57: #{tversky_loss.1} parent=42 // loop_exit
                  _
              $region43: #{tversky_loss.1} parent=27 // pred_fallthru
                _
            $region28: #{tversky_loss.1} parent=23 // pred_fallthru
              _
            // Predicated region
            $region29: #{tversky_loss.1} parent=23 // pred_check
              _
            $region30: #{tversky_loss.1} parent=23 // pred_check_branch
              %174 = sbr.rel (0) target = $region32
            $region31: #{tversky_loss.1} parent=23 // pred_region
              loop: start=0, step=1, limit=1
              $region33: #{tversky_loss.1} parent=31 // loop_pre_header
                _
              $region34: #{tversky_loss.1} parent=31 // loop_header
                %s177 = sphi 0, %s181
                %p178 = scmp.ge.s32.totalorder %s177, 1
                %s182 = sphi %s168, %s168
                %s183 = sphi %s166, %s166
              $region35: #{tversky_loss.1} parent=31 // loop_header_branch
                %180 = sbr.rel (%p178) target = $region39
              $region36: #{tversky_loss.1} parent=31 // loop_body
                %v184 = vld [vmem:[%s182] sm:$0xf]
                %185 = vst [vmem:[%s183] sm:$0xf] %v184
                %v186 = vld [vmem:[%s182 + $0x8] sm:$0xf]
                %187 = vst [vmem:[%s183 + $0x4] sm:$0xf] %v186
              $region37: #{tversky_loss.1} parent=31 // loop_footer
                %s181 = sadd.s32 1, %s177
              $region38: #{tversky_loss.1} parent=31 // loop_footer_branch
                %176 = sbr.rel target = $region34
              $region39: #{tversky_loss.1} parent=31 // loop_exit
                _
            $region32: #{tversky_loss.1} parent=23 // pred_fallthru
              _
          $region24: #{tversky_loss.1} parent=19 // pred_fallthru
            _
          %211 = vnop
        $region20: #{tversky_loss.1} parent=15 // pred_fallthru
          _
        // Predicated region
        $region58: #{tversky_loss.1} parent=15 // pred_check
          %p212 = pneg %p57
        $region59: #{tversky_loss.1} parent=15 // pred_check_branch
          %214 = sbr.rel (%p212) target = $region61
        $region60: #{tversky_loss.1} parent=15 // pred_region
          %p215 = scmp.lt.s32.totalorder %s11, 1
          %s216 = scalar_select %p215, %s11, 1
          %s217 = smul.addr %s216, 2
          %s218 = scalar_lea.vmem %s1, %s217
        $region61: #{tversky_loss.1} parent=15 // pred_fallthru
          _
      $region16: #{tversky_loss.1} parent=5 // pred_fallthru
        _
      %p219 = scmp.le.s32.totalorder 1, %s11
      %p220 = scmp.lt.s32.totalorder %s11, 3
      %p221 = pnand %p219, %p220
      %p222 = pneg %p221
      // Predicated region
      $region62: #{tversky_loss.1} parent=5 // pred_check
        _
      $region63: #{tversky_loss.1} parent=5 // pred_check_branch
        %224 = sbr.rel (%p221) target = $region65
      $region64: #{tversky_loss.1} parent=5 // pred_region
        %s225 = ssub.s32 %s11, 1
        %s226 = sand.u32 %s24, 1
        %s227 = sand.u32 %s24, 1
        %s228 = smul.addr %s227, 8
        %s229 = scalar_lea.vmem [#allocation2], %s228
        // Predicated region
        $region66: #{tversky_loss.1} parent=64 // pred_check
          %p230 = pneg %p37
        $region67: #{tversky_loss.1} parent=64 // pred_check_branch
          %232 = sbr.rel (%p230) target = $region69
        $region68: #{tversky_loss.1} parent=64 // pred_region
          _
        $region69: #{tversky_loss.1} parent=64 // pred_fallthru
          _
        %s233 = sand.u32 %s24, 1
        %s234 = sand.u32 %s24, 1
        %s235 = smul.addr %s234, 8
        %s236 = scalar_lea.vmem [#allocation2], %s235
        %p237 = pneg %p37
        %p238 = pneg %p34
        %p239 = scmp.lt.s32.totalorder %s16, 1
        %s240 = scalar_select %p239, %s16, 1
        %s241 = smul.addr %s240, 2
        %s242 = scalar_lea.vmem %s1, %s241
        %p243 = pneg %p63
        %p244 = pneg %p60
        %p245 = pneg %p89
        %p246 = pneg %p86
        %p247 = scmp.lt.s32.totalorder %s16, 1
        %s248 = scalar_select %p247, %s16, 1
        %s249 = smul.addr %s248, 2
        %s250 = smul.addr %s249, 4
        %s251 = scalar_lea.vmem %s2, %s250
        %p252 = pneg %p115
        %p253 = pneg %p112
        %p254 = scmp.lt.s32.totalorder %s16, 1
        %s255 = scalar_select %p254, %s16, 1
        %s256 = smul.addr %s255, 2
        %s257 = smul.addr %s256, 4
        %s258 = scalar_lea.vmem %s3, %s257
        %p259 = pneg %p141
        %p260 = pneg %p138
        %p261 = scmp.lt.s32.totalorder %s16, 1
        %s262 = scalar_select %p261, %s16, 1
        %s263 = smul.addr %s262, 2
        %s264 = smul.addr %s263, 4
        %s265 = scalar_lea.vmem %s4, %s264
        %p266 = scmp.lt.s32.totalorder %s16, 1
        %s267 = scalar_select %p266, %s16, 1
        %s268 = smul.addr %s267, 2
        %s269 = scalar_lea.vmem %s1, %s268
        %p270 = scmp.lt.s32.totalorder %s16, 1
        %s271 = scalar_select %p270, %s16, 1
        %s272 = smul.addr %s271, 2
        %s273 = smul.addr %s272, 4
        %s274 = scalar_lea.vmem %s2, %s273
        %p275 = scmp.lt.s32.totalorder %s16, 1
        %s276 = scalar_select %p275, %s16, 1
        %s277 = smul.addr %s276, 2
        %s278 = smul.addr %s277, 4
        %s279 = scalar_lea.vmem %s3, %s278
        %p280 = scmp.lt.s32.totalorder %s16, 1
        %s281 = scalar_select %p280, %s16, 1
        %s282 = smul.addr %s281, 2
        %s283 = smul.addr %s282, 4
        %s284 = scalar_lea.vmem %s4, %s283
        %v285 = vld [vmem:[%s229] sm:$0xf]
        %v286 = vld [vmem:[%s229 + $0x4] sm:$0xf]
        %v287 = vld [vmem:[%s269] sm:$0x3]
        %v288 = vxor.u32 %v285, 2147483648
        %v289 = vxor.u32 %v286, 2147483648
        %v290 = vmul.f32 %v288, 1.442695
        %v291 = vpow.pop %v290
        %v292 = vmul.f32 %v289, 1.442695
        %v293 = vpow.pop %v292
        %v294 = vadd.f32 %v291, 1.0
        %v295 = vadd.f32 %v293, 1.0
        %v296 = vrcp.pop %v294
        %v297 = vmul.f32 1.0, %v296
        %v298 = vrcp.pop %v295
        %v299 = vmul.f32 1.0, %v298
        %v300 = vlaneseq
        %v301 = vshrl.u32 %v300, 7
        %v303 = vunpack.c.l.s4 1966171168
        %v304 = vunpack.c.0.s8 %v303
        %v305 = vlaneseq
        %v306 = vshrl.u32 %v305, 7
        %v307 = vsub.s32 %v304, %v306
        %v308 = vrot.slane %v287, %v307
        %v309 = vcombine.high %v308, %v308
        %v311 = vunpack.c.l.s4 1966171168
        %v312 = vunpack.c.0.s8 %v311
        %v313 = vlaneseq
        %v314 = vshrl.u32 %v313, 7
        %v315 = vsub.s32 %v312, %v314
        %v316 = vrot.slane %v308, %v315
        %v318 = vunpack.c.l.s4 1966171168
        %v319 = vunpack.c.0.s8 %v318
        %v320 = vlaneseq
        %v321 = vshrl.u32 %v320, 7
        %v322 = vsub.s32 %v319, %v321
        %v323 = vrot.slane %v309, %v322
        %v324 = vlaneseq
        %v325 = vshrl.u32 %v324, 7
        %v326 = vsub.s32 0, %v325
        %v327 = vrot.slane %v316, %v326
        %v328 = vlaneseq
        %v329 = vshrl.u32 %v328, 7
        %v330 = vsub.s32 0, %v329
        %v331 = vrot.slane %v323, %v330
        %vm332 = vcmp.eq.s32.totalorder %v327, %v301
        %vm333 = vcmp.eq.s32.totalorder %v331, %v301
        %v334 = vsel %vm332, 1, 0
        %v335 = vsel %vm333, 1, 0
        %v336 = vcvt.s32.f32 %v334
        %v337 = vcvt.s32.f32 %v335
        %v338 = vmul.f32 %v297, %v336
        %v339 = vmul.f32 %v299, %v337
        %vm340 = vcmask 1043456
        %v341 = vsel %vm340, %v338, 0.0
        %342 = vadd.xlane.f32.xlu0 %v341
        %v343 = vpop.xlane.xlu0 %342
        %v344 = vsel %vm340, %v339, 0.0
        %345 = vadd.xlane.f32.xlu0 %v344
        %v346 = vpop.xlane.xlu0 %345
        %vm347 = vcmask 3072
        %348 = vst.msk [vmem:[%s274] sm:$0xf] %vm347, %v343
        %349 = vst.msk [vmem:[%s274 + $0x4] sm:$0xf] %vm347, %v346
        %v350 = vsel %vm340, %v297, 0.0
        %351 = vadd.xlane.f32.xlu0 %v350
        %v352 = vpop.xlane.xlu0 %351
        %v353 = vsel %vm340, %v299, 0.0
        %354 = vadd.xlane.f32.xlu0 %v353
        %v355 = vpop.xlane.xlu0 %354
        %356 = vst.msk [vmem:[%s279] sm:$0xf] %vm347, %v352
        %357 = vst.msk [vmem:[%s279 + $0x4] sm:$0xf] %vm347, %v355
        %v358 = vsel %vm340, %v336, 0.0
        %359 = vadd.xlane.f32.xlu0 %v358
        %v360 = vpop.xlane.xlu0 %359
        %v361 = vsel %vm340, %v337, 0.0
        %362 = vadd.xlane.f32.xlu0 %v361
        %v363 = vpop.xlane.xlu0 %362
        %364 = vst.msk [vmem:[%s284] sm:$0xf] %vm347, %v360
        %365 = vst.msk [vmem:[%s284 + $0x4] sm:$0xf] %vm347, %v363
        %p366 = scmp.lt.s32.totalorder %s16, 1
        %s367 = scalar_select %p366, %s16, 1
        %s368 = smul.addr %s367, 2
        %s369 = smul.addr %s368, 4
        %s370 = scalar_lea.vmem %s2, %s369
        %p371 = scmp.lt.s32.totalorder %s16, 1
        %s372 = scalar_select %p371, %s16, 1
        %s373 = smul.addr %s372, 2
        %s374 = smul.addr %s373, 4
        %s375 = scalar_lea.vmem %s3, %s374
        %p376 = scmp.lt.s32.totalorder %s16, 1
        %s377 = scalar_select %p376, %s16, 1
        %s378 = smul.addr %s377, 2
        %s379 = smul.addr %s378, 4
        %s380 = scalar_lea.vmem %s4, %s379
        // Predicated region
        $region70: #{tversky_loss.1} parent=64 // pred_check
          %p381 = pneg %p86
        $region71: #{tversky_loss.1} parent=64 // pred_check_branch
          %383 = sbr.rel (%p381) target = $region73
        $region72: #{tversky_loss.1} parent=64 // pred_region
          _
        $region73: #{tversky_loss.1} parent=64 // pred_fallthru
          _
        // Predicated region
        $region74: #{tversky_loss.1} parent=64 // pred_check
          %p384 = pneg %p112
        $region75: #{tversky_loss.1} parent=64 // pred_check_branch
          %386 = sbr.rel (%p384) target = $region77
        $region76: #{tversky_loss.1} parent=64 // pred_region
          _
        $region77: #{tversky_loss.1} parent=64 // pred_fallthru
          _
        // Predicated region
        $region78: #{tversky_loss.1} parent=64 // pred_check
          %p387 = pneg %p138
        $region79: #{tversky_loss.1} parent=64 // pred_check_branch
          %389 = sbr.rel (%p387) target = $region81
        $region80: #{tversky_loss.1} parent=64 // pred_region
          _
        $region81: #{tversky_loss.1} parent=64 // pred_fallthru
          _
      $region65: #{tversky_loss.1} parent=5 // pred_fallthru
        _
      %p390 = scmp.le.s32.totalorder 2, %s11
      // Predicated region
      $region82: #{tversky_loss.1} parent=5 // pred_check
        %p391 = pneg %p390
      $region83: #{tversky_loss.1} parent=5 // pred_check_branch
        %393 = sbr.rel (%p391) target = $region85
      $region84: #{tversky_loss.1} parent=5 // pred_region
        %s394 = ssub.s32 %s11, 2
        // Predicated region
        $region86: #{tversky_loss.1} parent=84 // pred_check
          %p395 = pneg %p92
        $region87: #{tversky_loss.1} parent=84 // pred_check_branch
          %397 = sbr.rel (%p395) target = $region89
        $region88: #{tversky_loss.1} parent=84 // pred_region
          %p398 = scmp.lt.s32.totalorder %s17, 1
          %s399 = scalar_select %p398, %s17, 1
          %s400 = smul.addr %s399, 2
          %s401 = smul.addr %s400, 4
          %s402 = scalar_lea.vmem %s2, %s401
        $region89: #{tversky_loss.1} parent=84 // pred_fallthru
          _
        // Predicated region
        $region90: #{tversky_loss.1} parent=84 // pred_check
          %p403 = pneg %p118
        $region91: #{tversky_loss.1} parent=84 // pred_check_branch
          %405 = sbr.rel (%p403) target = $region93
        $region92: #{tversky_loss.1} parent=84 // pred_region
          %p406 = scmp.lt.s32.totalorder %s17, 1
          %s407 = scalar_select %p406, %s17, 1
          %s408 = smul.addr %s407, 2
          %s409 = smul.addr %s408, 4
          %s410 = scalar_lea.vmem %s3, %s409
        $region93: #{tversky_loss.1} parent=84 // pred_fallthru
          _
        // Predicated region
        $region94: #{tversky_loss.1} parent=84 // pred_check
          %p411 = pneg %p144
        $region95: #{tversky_loss.1} parent=84 // pred_check_branch
          %413 = sbr.rel (%p411) target = $region97
        $region96: #{tversky_loss.1} parent=84 // pred_region
          %p414 = scmp.lt.s32.totalorder %s17, 1
          %s415 = scalar_select %p414, %s17, 1
          %s416 = smul.addr %s415, 2
          %s417 = smul.addr %s416, 4
          %s418 = scalar_lea.vmem %s4, %s417
        $region97: #{tversky_loss.1} parent=84 // pred_fallthru
          _
      $region85: #{tversky_loss.1} parent=5 // pred_fallthru
        _
    $region6: #{tversky_loss.1} parent=1 // loop_footer
      %s15 = sadd.s32 1, %s11
    $region7: #{tversky_loss.1} parent=1 // loop_footer_branch
      %10 = sbr.rel target = $region3
    $region8: #{tversky_loss.1} parent=1 // loop_exit
      _

</llo_original>
